<compile_context>
chip_gen: v6e
topology: v6e:2x2x1
jax: 0.10.0
libtpu: 0.0.40
codegen_flags: <defaults>
</compile_context>

<pallas_src>
from collections import OrderedDict

import jax
import jax.numpy as jnp
from jax.experimental import pallas as pl
from jax.experimental.pallas import tpu as pltpu


LANE = 128   # lane width / channel padding multiple
TM = 512     # target rows per tile for the 1x1 (lateral) matmul (multiple of 256)
TH3 = 32     # max output rows per tile for the 3x3 conv
             # TODO(synk): on v7x (64 MiB/TC VMEM) cap TH3 at 16 for C>=256 levels.


def _round_up(x, m):
    return (x + m - 1) // m * m


def _compiler_params(sem, vmem_bytes):
    # generous scoped-VMEM limit with headroom, capped below v7x's 64 MiB/TC.
    limit = int(min(max(vmem_bytes + (8 << 20), 32 << 20), 56 << 20))
    return pltpu.CompilerParams(dimension_semantics=sem, vmem_limit_bytes=limit)


# ----------------------------- 1x1 lateral kernels ---------------------------

def _lateral_kernel(x_ref, w_ref, b_ref, o_ref):
    # (TM, K) @ (K, C) + bias -> bf16 tile
    acc = jnp.dot(x_ref[...], w_ref[...], preferred_element_type=jnp.float32)
    o_ref[...] = (acc + b_ref[...]).astype(o_ref.dtype)


def _lateral_add_kernel(x_ref, w_ref, b_ref, add_ref, o_ref):
    # fallback: fused lateral 1x1 conv + bias + pre-materialized top-down add
    acc = jnp.dot(x_ref[...], w_ref[...], preferred_element_type=jnp.float32)
    acc = acc + b_ref[...] + add_ref[...].astype(jnp.float32)
    o_ref[...] = acc.astype(o_ref.dtype)


def _lateral_add_up2_kernel(x_ref, w_ref, b_ref, td_ref, o_ref):
    # x_ref: (TH, W, Cin); td_ref: (TH//2, W, Cp) (already 2x in W);
    # o_ref: (TH, W, Cp).  The 2x nearest H-expansion of the top-down path is a
    # leading-dim broadcast (no sublane/lane relayout).
    th, wd, cin = x_ref.shape
    cp = o_ref.shape[-1]
    acc = jnp.dot(x_ref[...].reshape(th * wd, cin), w_ref[...],
                  preferred_element_type=jnp.float32)
    acc = (acc + b_ref[...]).reshape(th // 2, 2, wd, cp)
    acc = acc + td_ref[...].astype(jnp.float32)[:, None, :, :]
    o_ref[...] = acc.reshape(th, wd, cp).astype(o_ref.dtype)


# ------------------------------- conv wrappers --------------------------------

def conv1x1_nhwc(x, w, b, add=None):
    """1x1 conv (+ optional pre-materialized add).  x: (N,H,W,Cin) bf16,
    w: (Cin,Cp) bf16, b: (1,Cp) f32, add: optional (N,H,W,Cp) bf16."""
    n, h, wd, cin = x.shape
    cp = w.shape[1]
    m = n * h * wd
    tm = min(TM, _round_up(m, 8))
    grid = (pl.cdiv(m, tm),)              # ragged tail handled by Pallas, no jnp.pad

    x2 = x.reshape(m, cin)                # contiguity-preserving (free)
    args = [x2, w, b]
    in_specs = [
        pl.BlockSpec((tm, cin), lambda i: (i, 0)),
        pl.BlockSpec((cin, cp), lambda i: (0, 0)),    # resident weight
        pl.BlockSpec((1, cp), lambda i: (0, 0)),      # resident bias
    ]
    kernel = _lateral_kernel
    add_bytes = 0
    if add is not None:
        args.append(add.reshape(m, cp))
        in_specs.append(pl.BlockSpec((tm, cp), lambda i: (i, 0)))
        kernel = _lateral_add_kernel
        add_bytes = m * cp * 2

    vmem = 2 * (tm * cin * 2 + 2 * tm * cp * 2) + cin * cp * 2 + cp * 4
    out = pl.pallas_call(
        kernel,
        out_shape=jax.ShapeDtypeStruct((m, cp), jnp.bfloat16),
        grid=grid,
        in_specs=in_specs,
        out_specs=pl.BlockSpec((tm, cp), lambda i: (i, 0)),
        compiler_params=_compiler_params(("parallel",), vmem),
        cost_estimate=pl.CostEstimate(
            flops=2 * m * cin * cp, transcendentals=0,
            bytes_accessed=m * cin * 2 + cin * cp * 2 + cp * 4 + m * cp * 2 + add_bytes),
    )(*args)
    return out.reshape(n, h, wd, cp)


def conv1x1_add_up2_nhwc(x, w, b, td_coarse):
    """Fused lateral 1x1 conv + bias + nearest-2x-upsampled top-down add.
    x: (N,H,W,Cin) bf16; td_coarse: (N,H/2,W/2,Cp) bf16.  H expansion comes free
    from the BlockSpec (half-height coarse blocks); only the W-doubled (half-size)
    tensor is materialized in HBM."""
    n, h, wd, cin = x.shape
    cp = w.shape[1]
    td_w = jnp.repeat(td_coarse, 2, axis=2)            # (N, H/2, W, Cp)

    th = max(2, -(-TM // wd))                          # rows so th*W >= TM
    th = min(th + (th % 2), h)                         # even, <= H (H is even here)
    grid = (n, pl.cdiv(h, th))

    vmem = (2 * (th * wd * cin * 2 + (th // 2) * wd * cp * 2 + th * wd * cp * 2)
            + cin * cp * 2 + cp * 4)
    out = pl.pallas_call(
        _lateral_add_up2_kernel,
        out_shape=jax.ShapeDtypeStruct((n, h, wd, cp), jnp.bfloat16),
        grid=grid,
        in_specs=[
            pl.BlockSpec((None, th, wd, cin), lambda ni, hi: (ni, hi, 0, 0)),
            pl.BlockSpec((cin, cp), lambda ni, hi: (0, 0)),       # resident weight
            pl.BlockSpec((1, cp), lambda ni, hi: (0, 0)),         # resident bias
            pl.BlockSpec((None, th // 2, wd, cp), lambda ni, hi: (ni, hi, 0, 0)),
        ],
        out_specs=pl.BlockSpec((None, th, wd, cp), lambda ni, hi: (ni, hi, 0, 0)),
        compiler_params=_compiler_params(("parallel", "parallel"), vmem),
        cost_estimate=pl.CostEstimate(
            flops=2 * n * h * wd * cin * cp, transcendentals=0,
            bytes_accessed=(n * h * wd * cin * 2 + n * (h // 2) * wd * cp * 2
                            + cin * cp * 2 + cp * 4 + n * h * wd * cp * 2)),
    )(x, w, b, td_w)
    return out


def conv3x3_nhwc(x, w, b, out_dtype=jnp.float32):
    """3x3 conv, padding=1.  x: (N,H,W,C) bf16, w: (9*C,Co) bf16 (rows ordered
    kh,kw,cin), b: (1,Co) f32.  The padded activation stays in HBM; each grid
    step fetches its (TH+2)-row halo tile via a double-buffered manual DMA."""
    n, h, wd, c = x.shape
    co = w.shape[1]

    th = min(TH3, _round_up(h, 8))     # output rows per tile (multiple of 8)
    ho = _round_up(h, th)
    t = ho // th
    wo = _round_up(wd, 8)
    wp = wo + 2

    # zero pad: 1-ring for the conv + extra rows/cols for tiling alignment
    xp = jnp.pad(x, ((0, 0), (1, 1 + (ho - h)), (1, 1 + (wo - wd)), (0, 0)))
    steps = n * t

    def kernel(x_hbm, w_ref, b_ref, o_ref, xbuf, sem):
        s = pl.program_id(0)
        nsteps = pl.num_programs(0)
        slot = s % 2

        def halo_src(step):
            ni = step // t
            ti = step % t
            return x_hbm.at[ni, pl.ds(ti * th, th + 2)]

        @pl.when(s == 0)
        def _():   # prime slot 0
            pltpu.make_async_copy(halo_src(0), xbuf.at[0], sem.at[0]).start()

        # wait for the current tile, then immediately prefetch the next one
        pltpu.make_async_copy(halo_src(s), xbuf.at[slot], sem.at[slot]).wait()

        @pl.when(s + 1 < nsteps)
        def _():
            pltpu.make_async_copy(
                halo_src(s + 1), xbuf.at[1 - slot], sem.at[1 - slot]).start()

        xt = xbuf[slot]                                        # (th+2, wp, c)
        # hoist the kw-shifted (sublane-misaligned) views: built once per tile
        big = jnp.concatenate(
            [xt[:, 0:wo, :], xt[:, 1:1 + wo, :], xt[:, 2:2 + wo, :]], axis=-1)
        # one K=3C dot per kh (rows sliced on the free leading dim): 3 accumulator
        # round-trips instead of 9
        acc = jnp.dot(big[0:th].reshape(th * wo, 3 * c), w_ref[0:3 * c, :],
                      preferred_element_type=jnp.float32)
        acc = acc + jnp.dot(big[1:1 + th].reshape(th * wo, 3 * c),
                            w_ref[3 * c:6 * c, :],
                            preferred_element_type=jnp.float32)
        acc = acc + jnp.dot(big[2:2 + th].reshape(th * wo, 3 * c),
                            w_ref[6 * c:9 * c, :],
                            preferred_element_type=jnp.float32)
        acc = acc + b_ref[...]
        o_ref[...] = acc.reshape(th, wo, co).astype(o_ref.dtype)

    vmem = (2 * (th + 2) * wp * c * 2          # double-buffered halo input
            + 2 * th * wo * co * 4             # double-buffered output
            + 9 * c * co * 2 + co * 4          # resident weight + bias
            + (th + 2) * wo * 3 * c * 2        # in-kernel kw-concat buffer
            + th * wo * co * 4)                # accumulator
    out = pl.pallas_call(
        kernel,
        out_shape=jax.ShapeDtypeStruct((n, ho, wo, co), out_dtype),
        grid=(steps,),
        in_specs=[
            pl.BlockSpec(memory_space=pl.ANY),              # padded activation, HBM
            pl.BlockSpec((9 * c, co), lambda s: (0, 0)),    # resident weight
            pl.BlockSpec((1, co), lambda s: (0, 0)),        # resident bias
        ],
        out_specs=pl.BlockSpec((None, th, wo, co), lambda s: (s // t, s % t, 0, 0)),
        scratch_shapes=[
            pltpu.VMEM((2, th + 2, wp, c), x.dtype),
            pltpu.SemaphoreType.DMA((2,)),
        ],
        # "arbitrary": the cross-step prefetch chain requires in-order execution
        compiler_params=_compiler_params(("arbitrary",), vmem),
        cost_estimate=pl.CostEstimate(
            flops=2 * n * ho * wo * 9 * c * co, transcendentals=0,
            bytes_accessed=(n * (ho + 2) * wp * c * 2 + 9 * c * co * 2 + co * 4
                            + n * ho * wo * co * 4)),
    )(xp, w, b)
    return out[:, :h, :wd]


def nearest_resize_nhwc(x, out_h, out_w):
    """Fallback (non-2x ratios): F.interpolate(..., mode='nearest') semantics."""
    n, in_h, in_w, c = x.shape
    idx_h = (jnp.arange(out_h) * in_h) // out_h
    idx_w = (jnp.arange(out_w) * in_w) // out_w
    x = jnp.take(x, idx_h, axis=1)
    x = jnp.take(x, idx_w, axis=2)
    return x


# ------------------------------- FPN module ----------------------------------

def init_fpn_params(key, in_channels_list, out_channels):
    """torchvision FPN init (kaiming_uniform a=1, bias=0), pre-transposed, channel
    padded to a multiple of 128 lanes and cast to bf16 (bias stays f32)."""
    cp = _round_up(out_channels, LANE)
    inner_w, inner_b, layer_w, layer_b = [], [], [], []
    for cin in in_channels_list:
        key, k1, k2 = jax.random.split(key, 3)
        # inner 1x1: fan_in = cin
        bound1 = (3.0 / cin) ** 0.5
        w1 = jax.random.uniform(k1, (cin, out_channels), jnp.float32, -bound1, bound1)
        w1 = jnp.pad(w1, ((0, 0), (0, cp - out_channels))).astype(jnp.bfloat16)
        b1 = jnp.zeros((1, cp), jnp.float32)
        # layer 3x3: fan_in = out_channels * 9, tap order (kh, kw, cin)
        bound3 = (3.0 / (out_channels * 9)) ** 0.5
        w3 = jax.random.uniform(
            k2, (9, out_channels, out_channels), jnp.float32, -bound3, bound3)
        w3 = jnp.pad(w3, ((0, 0), (0, cp - out_channels), (0, cp - out_channels)))
        w3 = w3.reshape(9 * cp, cp).astype(jnp.bfloat16)
        b3 = jnp.zeros((1, cp), jnp.float32)
        inner_w.append(w1); inner_b.append(b1)
        layer_w.append(w3); layer_b.append(b3)
    return {"inner_w": inner_w, "inner_b": inner_b,
            "layer_w": layer_w, "layer_b": layer_b,
            "out_channels": out_channels}


def fpn_forward(inputs_nchw, params):
    """inputs_nchw: OrderedDict[name -> (N,C,H,W)] f32.  Returns same keys, NCHW f32,
    each with out_channels channels (extra_blocks=None, norm_layer=None)."""
    names = list(inputs_nchw.keys())
    # cast first so the boundary transpose writes bf16
    xs = [jnp.transpose(inputs_nchw[k].astype(jnp.bfloat16), (0, 2, 3, 1))
          for k in names]
    num = len(xs)
    out_channels = params["out_channels"]

    # top level
    last_inner = conv1x1_nhwc(xs[-1], params["inner_w"][-1], params["inner_b"][-1])
    results = [conv3x3_nhwc(last_inner, params["layer_w"][-1], params["layer_b"][-1])]

    # top-down pathway
    for idx in range(num - 2, -1, -1):
        x = xs[idx]
        _, h, wd, _ = x.shape
        _, h2, w2, _ = last_inner.shape
        if h == 2 * h2 and wd == 2 * w2 and wd % 8 == 0:
            # exact-2x pyramid: fuse the nearest upsample into the lateral kernel
            last_inner = conv1x1_add_up2_nhwc(
                x, params["inner_w"][idx], params["inner_b"][idx], last_inner)
        else:
            # TODO(synk): fuse non-2x nearest resize into the lateral kernel too.
            top_down = nearest_resize_nhwc(last_inner, h, wd)
            last_inner = conv1x1_nhwc(
                x, params["inner_w"][idx], params["inner_b"][idx], add=top_down)
        results.insert(
            0, conv3x3_nhwc(last_inner, params["layer_w"][idx], params["layer_b"][idx]))

    return OrderedDict(
        (k, jnp.transpose(r[..., :out_channels], (0, 3, 1, 2)))
        for k, r in zip(names, results))


# --------------------------- pure-XLA f32 reference ---------------------------

def _fpn_reference(inputs_nchw, params, out_channels):
    names = list(inputs_nchw.keys())
    xs = [jnp.transpose(inputs_nchw[k], (0, 2, 3, 1)) for k in names]   # NHWC f32
    num = len(xs)

    def inner(i, x):
        w = params["inner_w"][i].astype(jnp.float32)[:, :out_channels]
        return jnp.einsum("nhwc,cd->nhwd", x, w)                        # bias = 0

    def layer(i, x):
        cp = params["layer_w"][i].shape[1]
        w = params["layer_w"][i].astype(jnp.float32).reshape(3, 3, cp, cp)
        w = w[:, :, :out_channels, :out_channels]                       # HWIO
        return jax.lax.conv_general_dilated(
            x, w, (1, 1), "SAME", dimension_numbers=("NHWC", "HWIO", "NHWC"))

    last = inner(num - 1, xs[-1])
    res = [layer(num - 1, last)]
    for idx in range(num - 2, -1, -1):
        td = jnp.repeat(jnp.repeat(last, 2, axis=1), 2, axis=2)         # exact 2x
        last = inner(idx, xs[idx]) + td
        res.insert(0, layer(idx, last))
    return [jnp.transpose(r, (0, 3, 1, 2)) for r in res]


# ---------------------------------- main --------------------------------------

if __name__ == "__main__":
    key = jax.random.PRNGKey(0)

    batch = 2
    in_channels_list = [4, 8, 16]
    out_channels = 32
    spatial = [16, 8, 4]   # typical pyramid: each level halves H, W

    key, kp = jax.random.split(key)
    params = init_fpn_params(kp, in_channels_list, out_channels)

    inputs = OrderedDict()
    for i, (c, s) in enumerate(zip(in_channels_list, spatial)):
        key, kx = jax.random.split(key)
        inputs[f"feat{i}"] = jax.random.normal(kx, (batch, c, s, s), jnp.float32)

    outputs = fpn_forward(inputs, params)
    outputs = jax.tree_util.tree_map(jax.block_until_ready, outputs)

    refs = _fpn_reference(inputs, params, out_channels)

    for i, (name, out) in enumerate(outputs.items()):
        assert out.shape == (batch, out_channels, spatial[i], spatial[i]), out.shape
        assert out.dtype == jnp.float32
        assert bool(jnp.isfinite(out).all())
        # bf16 activations / f32 accumulation vs f32 reference: loose tolerance
        diff = float(jnp.max(jnp.abs(out - refs[i])))
        assert diff < 0.2, (name, diff)

    print("KERNEL_OK")
</pallas_src>

<mosaic_0001>
module attributes {stable_mosaic.version = 11 : i64} {
  func.func @_lateral_kernel(%arg0: i32, %arg1: memref<32x16xbf16, #tpu.memory_space<vmem>>, %arg2: memref<16x128xbf16, #tpu.memory_space<vmem>>, %arg3: memref<1x128xf32, #tpu.memory_space<vmem>>, %arg4: memref<32x128xbf16, #tpu.memory_space<vmem>>) attributes {dimension_semantics = [#tpu.dimension_semantics<parallel>], iteration_bounds = array<i64: 1>, scalar_prefetch = 0 : i64, scratch_operands = 0 : i64, tpu.core_type = #tpu.core_type<tc>, window_params = [{transform_indices = @transform_0, window_bounds = array<i64: 32, 16>}, {pipeline_mode = #tpu.pipeline_mode<synchronous>, transform_indices = @transform_1, window_bounds = array<i64: 16, 128>}, {pipeline_mode = #tpu.pipeline_mode<synchronous>, transform_indices = @transform_2, window_bounds = array<i64: 1, 128>}, {transform_indices = @transform_3, window_bounds = array<i64: 32, 128>}]} {
    %c0 = arith.constant 0 : index
    %c0_0 = arith.constant 0 : index
    %0 = vector.load %arg1[%c0, %c0_0] : memref<32x16xbf16, #tpu.memory_space<vmem>>, vector<32x16xbf16>
    %c0_1 = arith.constant 0 : index
    %c0_2 = arith.constant 0 : index
    %1 = vector.load %arg2[%c0_1, %c0_2] : memref<16x128xbf16, #tpu.memory_space<vmem>>, vector<16x128xbf16>
    %cst = arith.constant dense<0.000000e+00> : vector<32x128xf32>
    %2 = tpu.matmul %0, %1, %cst {dimension_numbers = #tpu.dot_dimension_numbers<[1], [0], [0], [1], [0, 0, 1, 1], [], []>} : vector<32x16xbf16>, vector<16x128xbf16>, vector<32x128xf32> -> vector<32x128xf32>
    %c0_3 = arith.constant 0 : index
    %c0_4 = arith.constant 0 : index
    %3 = vector.load %arg3[%c0_3, %c0_4] : memref<1x128xf32, #tpu.memory_space<vmem>>, vector<1x128xf32>
    %4 = vector.broadcast %3 : vector<1x128xf32> to vector<32x128xf32>
    %5 = arith.addf %2, %4 : vector<32x128xf32>
    %6 = arith.truncf %5 : vector<32x128xf32> to vector<32x128xbf16>
    %c0_5 = arith.constant 0 : index
    %c0_6 = arith.constant 0 : index
    %7 = vector.load %arg4[%c0_5, %c0_6] : memref<32x128xbf16, #tpu.memory_space<vmem>>, vector<32x128xbf16>
    tpu.vector_store %arg4[%c0_5, %c0_6], %6 {strides = array<i32>} : memref<32x128xbf16, #tpu.memory_space<vmem>>, vector<32x128xbf16>,
    return
  }
  func.func @transform_0(%arg0: i32) -> (i32, i32) {
    %c0_i32 = arith.constant 0 : i32
    %c0_i32_0 = arith.constant 0 : i32
    return %arg0, %c0_i32 : i32, i32
  }
  func.func @transform_1(%arg0: i32) -> (i32, i32) {
    %c0_i32 = arith.constant 0 : i32
    %c0_i32_0 = arith.constant 0 : i32
    %c0_i32_1 = arith.constant 0 : i32
    return %c0_i32, %c0_i32_0 : i32, i32
  }
  func.func @transform_2(%arg0: i32) -> (i32, i32) {
    %c0_i32 = arith.constant 0 : i32
    %c0_i32_0 = arith.constant 0 : i32
    %c0_i32_1 = arith.constant 0 : i32
    return %c0_i32, %c0_i32_0 : i32, i32
  }
  func.func @transform_3(%arg0: i32) -> (i32, i32) {
    %c0_i32 = arith.constant 0 : i32
    %c0_i32_0 = arith.constant 0 : i32
    return %arg0, %c0_i32 : i32, i32
  }
}

</mosaic_0001>

<llo_original>
// kernel: tpu_custom_call.1
$region0: #{tpu_custom_call.1}
  #allocation0 [shape = 'u32[]', space=smem, size = 0x4, offset = 0x4, fixed_abs, tag = 'smem constant byte address 0x4 - core index']
  #allocation1 [shape = 'u32[144,128]{1,0:T(1,128)}', space=vmem, size = 0x12000, scoped, tag = 'internal scratch']
  %s0 = inlined_call_operand.vmem [shape: bf16[32,16], index: 0, kind: input, shape index: {}]
  %s1 = inlined_call_operand.vmem [shape: bf16[16,128], index: 1, kind: input, shape index: {}]
  %s2 = inlined_call_operand.vmem [shape: f32[1,128], index: 2, kind: input, shape index: {}]
  %s3 = inlined_call_operand.hbm [shape: bf16[32,128], index: 3, kind: output, shape index: {}]
  %s4 = sld [smem:[#allocation0]]
  $region22: #{tpu_custom_call.1} parent=0
    _
  %s6 = ssub.s32 1, %s4
  %s7 = scalar_select 0, %s6, %s4
  $region1: #{tpu_custom_call.1} parent=0
    #allocation2 [shape = 'u8[8192]{0}', space=vmem, size = 0x2000, scoped, tag = 'output window, operand 0, single buffered']
    #allocation3 [shape = 's32[1]{0}', space=sflag, size = 0x4, scoped, tag = 'scoped memory for tpu_custom_call.1']
    %8 = vsyncpa [#allocation3], 0
    // Predicated region
    $region2: #{tpu_custom_call.1} parent=1 // pred_check
      _
    $region3: #{tpu_custom_call.1} parent=1 // pred_check_branch
      %10 = sbr.rel (0) target = $region5
    $region4: #{tpu_custom_call.1} parent=1 // pred_region
      _
    $region5: #{tpu_custom_call.1} parent=1 // pred_fallthru
      _
    // Predicated region
    $region6: #{tpu_custom_call.1} parent=1 // pred_check
      _
    $region7: #{tpu_custom_call.1} parent=1 // pred_check_branch
      %12 = sbr.rel (0) target = $region9
    $region8: #{tpu_custom_call.1} parent=1 // pred_region
      _
    $region9: #{tpu_custom_call.1} parent=1 // pred_fallthru
      _
    // Predicated region
    $region10: #{tpu_custom_call.1} parent=1 // pred_check
      _
    $region11: #{tpu_custom_call.1} parent=1 // pred_check_branch
      %14 = sbr.rel (0) target = $region13
    $region12: #{tpu_custom_call.1} parent=1 // pred_region
      _
    $region13: #{tpu_custom_call.1} parent=1 // pred_fallthru
      _
    %v16 = vld [vmem:[%s0] sm:$0xf]
    %v17 = vld [vmem:[%s0 + $0x4] sm:$0xf]
    %v18 = vld [vmem:[%s0 + $0x8] sm:$0xf]
    %v19 = vld [vmem:[%s0 + $0xc] sm:$0xf]
    %v20 = vld [vmem:[%s1] sm:$0xf]
    %v21 = vld [vmem:[%s1 + $0x4] sm:$0xf]
    %v22 = vld [vmem:[%s2] sm:$0x1]
    %v24 = vlaneseq
    %v25 = vshrl.u32 %v24, 7
    %v26 = vsub.s32 0, %v25
    %v27 = vrot.slane %v22, %v26
    %v33 = vunpack.c.l.b16 %v16
    %v34 = vunpack.c.l.b16 %v17
    %v35 = vunpack.c.l.b16 %v18
    %v36 = vunpack.c.l.b16 %v19
    %v37 = vpack.c.b16 %v34, %v33
    %v38 = vpack.c.b16 %v36, %v35
    %v41 = vunpack.c.l.b16 %v20
    %v42 = vunpack.c.l.b16 %v21
    %v43 = vpack.c.b16 %v42, %v41
    %vm45 = vcmask 130048
    %v47 = vsel %vm45, %v37, 0
    %v50 = vsel %vm45, %v38, 0
    %52 = vmatprep.subr.bf16.mxu0 0
    %53 = vmatpush1.bf16.msra.mxu0 0
    %54 = vmatprep.subr.bf16.mxu0 0
    %55 = vmatpush1.bf16.msra.mxu0 0
    %56 = vmatprep.subr.bf16.mxu0 0
    %57 = vmatpush1.bf16.msra.mxu0 0
    %58 = vmatprep.subr.bf16.mxu0 0
    %59 = vmatpush1.bf16.msra.mxu0 0
    %60 = vmatprep.subr.bf16.mxu0 0
    %61 = vmatpush1.bf16.msra.mxu0 0
    %62 = vmatprep.subr.bf16.mxu0 0
    %63 = vmatpush1.bf16.msra.mxu0 0
    %64 = vmatprep.subr.bf16.mxu0 0
    %65 = vmatpush1.bf16.msra.mxu0 0
    %66 = vmatprep.subr.bf16.mxu0 0
    %67 = vmatpush1.bf16.msra.mxu0 %v43
    %68 = vmatprep.subr.bf16.mxu0 0
    %69 = vmatpush2.bf16.msra.mxu0 0
    %70 = vmatprep.subr.bf16.mxu0 0
    %71 = vmatpush2.bf16.msra.mxu0 0
    %72 = vmatprep.subr.bf16.mxu0 0
    %73 = vmatpush2.bf16.msra.mxu0 0
    %74 = vmatprep.subr.bf16.mxu0 0
    %75 = vmatpush2.bf16.msra.mxu0 0
    %76 = vmatprep.subr.bf16.mxu0 0
    %77 = vmatpush2.bf16.msra.mxu0 0
    %78 = vmatprep.subr.bf16.mxu0 0
    %79 = vmatpush2.bf16.msra.mxu0 0
    %80 = vmatprep.subr.bf16.mxu0 0
    %81 = vmatpush2.bf16.msra.mxu0 0
    %82 = vmatprep.subr.bf16.mxu0 0
    %83 = vmatpush2.bf16.msra.mxu0 0
    %84 = vmatprep.mubr.bf16.mxu0 0
    %85 = vmatmul.mubr.bf16.gmra.mxu0 %v47
    %v86 = vpop.f32.mrf.mxu0
    %v87 = vadd.f32 %v27, %v86
    %v88 = vpop.f32.mrf.mxu0
    %v89 = vpop.f32.mrf.mxu0
    %v90 = vadd.f32 %v27, %v89
    %v91 = vpop.f32.mrf.mxu0
    %92 = vmatprep.mubr.bf16.mxu0 0
    %93 = vmatmul.mubr.bf16.gmra.mxu0 %v50
    %v94 = vpop.f32.mrf.mxu0
    %v95 = vadd.f32 %v27, %v94
    %v96 = vpop.f32.mrf.mxu0
    %v97 = vpop.f32.mrf.mxu0
    %v98 = vadd.f32 %v27, %v97
    %v99 = vpop.f32.mrf.mxu0
    %100 = vdwg.mxu0
    %v101 = vpack.c.bf16 %v90, %v87
    %v102 = vpack.c.bf16 %v98, %v95
    %v105 = vunpack.c.l.b16 %v101
    %v106 = vunpack.c.h.b16 %v101
    %v107 = vunpack.c.l.b16 %v102
    %v108 = vunpack.c.h.b16 %v102
    %v109 = vpack.c.b16 %v105, %v105
    %v110 = vpack.c.b16 %v106, %v106
    %v111 = vpack.c.b16 %v107, %v107
    %v112 = vpack.c.b16 %v108, %v108
    %117 = vst [vmem:[#allocation2] sm:$0xf] %v109
    %118 = vst [vmem:[#allocation2 + $0x4] sm:$0xf] %v110
    %119 = vst [vmem:[#allocation2 + $0x8] sm:$0xf] %v111
    %120 = vst [vmem:[#allocation2 + $0xc] sm:$0xf] %v112
    // Predicated region
    $region14: #{tpu_custom_call.1} parent=1 // pred_check
      _
    $region15: #{tpu_custom_call.1} parent=1 // pred_check_branch
      %122 = sbr.rel (0) target = $region17
    $region16: #{tpu_custom_call.1} parent=1 // pred_region
      %s124 = ssub.s32 256, 256
      %125 = vsyncadd [#allocation3], %s124
      %s126 = sshll.u32 [#allocation2], 4
      %s127 = int_to_ptr.vmem [resolvable:$true] %s126
      %132 = dma.vmem_to_hbm [thread:$0]  %s127, 256, %s3, [#allocation3], 64, 64, 4
    $region17: #{tpu_custom_call.1} parent=1 // pred_fallthru
      _
    // Predicated region
    $region18: #{tpu_custom_call.1} parent=1 // pred_check
      _
    $region19: #{tpu_custom_call.1} parent=1 // pred_check_branch
      %134 = sbr.rel (0) target = $region21
    $region20: #{tpu_custom_call.1} parent=1 // pred_region
      %135 = dma.done [#allocation3], 256
    $region21: #{tpu_custom_call.1} parent=1 // pred_fallthru
      _
    %136 = vsyncpa [#allocation3], 1

</llo_original>
